<compile_context>
chip_gen: v7x
topology: tpu7x:2x2x1
jax: 0.10.0
libtpu: 0.0.40
codegen_flags: <defaults>
</compile_context>

<pallas_src>
import math
import numpy as np

import jax
import jax.numpy as jnp
from jax import lax
from jax.experimental import pallas as pl
from jax.experimental.pallas import tpu as pltpu


# ----------------------------------------------------------------------------
# Pallas kernels
# ----------------------------------------------------------------------------

def pallas_matmul_bias(a, b, bias, act=None, out_dtype=jnp.float32):
    """(M, K) @ (K, N) + bias[N]  — bf16 MXU inputs, f32 accumulate.

    act: None | "silu" (fused VPU/EUP epilogue).  out_dtype: f32 or bf16.
    """
    M, K = a.shape
    K2, N = b.shape
    assert K == K2
    a = a.astype(jnp.bfloat16)
    b = b.astype(jnp.bfloat16)
    bias = bias.astype(jnp.float32).reshape(1, N)

    out_bytes = jnp.dtype(out_dtype).itemsize
    Mp = ((M + 7) // 8) * 8
    # adaptive M tile: biggest candidate that divides Mp and fits a VMEM budget
    # (2x for double buffering of a/b/out blocks + the f32 accumulator).
    budget = 20 * 1024 * 1024
    TM = 8
    for cand in (1024, 512, 256, 128, 64, 32, 16, 8):
        if Mp % cand:
            continue
        vmem = 2 * (cand * K * 2 + K * N * 2 + cand * N * out_bytes) + cand * N * 4
        if vmem <= budget:
            TM = cand
            break
    if Mp != M:
        a = jnp.pad(a, ((0, Mp - M), (0, 0)))

    def kernel(a_ref, b_ref, bias_ref, o_ref):
        acc = jnp.dot(a_ref[...], b_ref[...], preferred_element_type=jnp.float32)
        acc = acc + bias_ref[...]
        if act == "silu":
            acc = acc * jax.nn.sigmoid(acc)
        o_ref[...] = acc.astype(o_ref.dtype)

    out = pl.pallas_call(
        kernel,
        out_shape=jax.ShapeDtypeStruct((Mp, N), out_dtype),
        grid=(Mp // TM,),
        in_specs=[
            pl.BlockSpec((TM, K), lambda i: (i, 0)),
            pl.BlockSpec((K, N), lambda i: (0, 0)),
            pl.BlockSpec((1, N), lambda i: (0, 0)),
        ],
        out_specs=pl.BlockSpec((TM, N), lambda i: (i, 0)),
        compiler_params=pltpu.CompilerParams(dimension_semantics=("parallel",)),
    )(a, b, bias)
    if Mp != M:
        out = out[:M]
    return out


def conv3d_fused3x3(x, w, b, extra_bias=None, out_dtype=jnp.float32):
    """3x3x3, stride-1, pad-1 conv in NDHWC.

    Single padded input (no 3x duplicated streams): grid=(N, D) with the whole
    padded per-sample volume as the input block (index_map constant in d, so
    it is DMA'd once per sample and stays resident in VMEM).  The 3 depth taps
    are merged along Cin (weights packed (9, 3*Cin, Cout)), so the kernel does
    9 MXU matmuls with K=3*Cin and a single f32 accumulator.
    `extra_bias` (N, Cout) is fused as a per-sample bias (time-embedding add).
    """
    N, D, H, W, Cin = x.shape
    Cout = w.shape[0]
    Dp, Hp, Wp = D + 2, H + 2, W + 2
    xp = jnp.pad(x.astype(jnp.bfloat16),
                 ((0, 0), (1, 1), (1, 1), (1, 1), (0, 0)))
    # pack as (kh*3+kw, kd*Cin + cin, cout)
    wr = jnp.transpose(w, (3, 4, 2, 1, 0)).reshape(9, 3 * Cin, Cout).astype(jnp.bfloat16)
    br = b.astype(jnp.float32).reshape(1, Cout)
    has_pb = extra_bias is not None
    operands = [xp, wr, br]
    if has_pb:
        operands.append(extra_bias.astype(jnp.float32).reshape(N, 1, Cout))

    def kernel(*refs):
        if has_pb:
            x_ref, w_ref, b_ref, pb_ref, o_ref = refs
        else:
            x_ref, w_ref, b_ref, o_ref = refs
        d = pl.program_id(1)
        # (3, Hp, Wp, Cin) window of the resident padded volume
        slab = x_ref[pl.ds(d, 3), :, :, :]
        # merge the 3 depth taps along the channel (lane) dim -> (Hp, Wp, 3*Cin)
        y = jnp.concatenate([slab[0], slab[1], slab[2]], axis=-1)
        acc = jnp.zeros((H * W, Cout), jnp.float32)
        for t in range(9):
            kh, kw = divmod(t, 3)
            a = y[kh:kh + H, kw:kw + W, :].reshape(H * W, 3 * Cin)
            acc = acc + jnp.dot(a, w_ref[t], preferred_element_type=jnp.float32)
        acc = acc + b_ref[...]
        if has_pb:
            acc = acc + pb_ref[...]
        o_ref[...] = acc.astype(o_ref.dtype)

    in_specs = [
        pl.BlockSpec((None, Dp, Hp, Wp, Cin), lambda n, d: (n, 0, 0, 0, 0)),
        pl.BlockSpec((9, 3 * Cin, Cout), lambda n, d: (0, 0, 0)),
        pl.BlockSpec((1, Cout), lambda n, d: (0, 0)),
    ]
    if has_pb:
        in_specs.append(pl.BlockSpec((None, 1, Cout), lambda n, d: (n, 0, 0)))

    out = pl.pallas_call(
        kernel,
        out_shape=jax.ShapeDtypeStruct((N, D, H * W, Cout), out_dtype),
        grid=(N, D),
        in_specs=in_specs,
        out_specs=pl.BlockSpec((None, None, H * W, Cout), lambda n, d: (n, d, 0, 0)),
        compiler_params=pltpu.CompilerParams(
            dimension_semantics=("parallel", "parallel")),
    )(*operands)
    return out.reshape(N, D, H, W, Cout)


def pallas_attention_proj(qkv, w_out, b_out, n, t, heads, dh):
    """Fused multi-head attention + output projection.

    qkv: (N*T, 3C) with [q | k | v] along the lane dim (C = heads*dh).
    Head split, per-head batched QK^T / softmax / PV, head merge and the
    output projection all run inside one Pallas invocation — no HBM
    transposes around the attention.
    """
    c = heads * dh
    scale = 1.0 / math.sqrt(dh)

    def kernel(qkv_ref, w_ref, b_ref, o_ref):
        qkv_v = qkv_ref[...]                               # (N*T, 3C) bf16
        head_outs = []
        for h in range(heads):
            q = qkv_v[:, h * dh:(h + 1) * dh].reshape(n, t, dh)
            k = qkv_v[:, c + h * dh:c + (h + 1) * dh].reshape(n, t, dh)
            v = qkv_v[:, 2 * c + h * dh:2 * c + (h + 1) * dh].reshape(n, t, dh)
            s = lax.dot_general(q, k, (((2,), (2,)), ((0,), (0,))),
                                preferred_element_type=jnp.float32) * scale
            m = jnp.max(s, axis=-1, keepdims=True)
            e = jnp.exp(s - m)
            p = e * pl.reciprocal(jnp.sum(e, axis=-1, keepdims=True), approx=True)
            oh = lax.dot_general(p.astype(jnp.bfloat16), v,
                                 (((2,), (1,)), ((0,), (0,))),
                                 preferred_element_type=jnp.float32)
            head_outs.append(oh)                           # (N, T, dh) f32
        o = jnp.concatenate(head_outs, axis=-1).reshape(n * t, c)
        o = jnp.dot(o.astype(jnp.bfloat16), w_ref[...],
                    preferred_element_type=jnp.float32) + b_ref[...]
        o_ref[...] = o

    return pl.pallas_call(
        kernel,
        out_shape=jax.ShapeDtypeStruct((n * t, c), jnp.float32),
    )(qkv.astype(jnp.bfloat16),
      w_out.astype(jnp.bfloat16),
      b_out.astype(jnp.float32).reshape(1, c))


# ----------------------------------------------------------------------------
# Conv dispatcher (channels-last NDHWC)
# ----------------------------------------------------------------------------

def conv3d_im2col(x, w, b, stride, padding, extra_bias=None,
                  out_dtype=jnp.float32):
    """Used only for the 3 stride-2 downsample convs and the Cin=1 stem conv.
    Patches are built directly in bf16 (no f32 im2col tensor in HBM)."""
    Cout, Cin, k, _, _ = w.shape
    N, D, H, W, C = x.shape
    assert C == Cin
    xp = jnp.pad(x.astype(jnp.bfloat16),
                 ((0, 0), (padding, padding), (padding, padding),
                  (padding, padding), (0, 0)))
    Do = (D + 2 * padding - k) // stride + 1
    Ho = (H + 2 * padding - k) // stride + 1
    Wo = (W + 2 * padding - k) // stride + 1
    patches = []
    for kd in range(k):
        for kh in range(k):
            for kw in range(k):
                patches.append(xp[:, kd:kd + stride * Do:stride,
                                  kh:kh + stride * Ho:stride,
                                  kw:kw + stride * Wo:stride, :])
    pat = jnp.stack(patches, axis=4)                   # (N, Do, Ho, Wo, k^3, C) bf16
    a = pat.reshape(N * Do * Ho * Wo, k * k * k * Cin)
    wm = jnp.transpose(w, (2, 3, 4, 1, 0)).reshape(k * k * k * Cin, Cout)
    out = pallas_matmul_bias(a, wm, b, out_dtype=out_dtype)
    out = out.reshape(N, Do, Ho, Wo, Cout)
    if extra_bias is not None:
        out = out + extra_bias[:, None, None, None, :].astype(out.dtype)
    return out


def conv3d(x, p, stride=1, padding=1, extra_bias=None, out_dtype=jnp.float32):
    w, b = p["w"], p["b"]
    Cout, Cin, k = w.shape[0], w.shape[1], w.shape[2]
    if k == 1:
        N, D, H, W, C = x.shape
        a = x.reshape(N * D * H * W, C)
        wm = w.reshape(Cout, Cin).T
        out = pallas_matmul_bias(a, wm, b, out_dtype=out_dtype)
        out = out.reshape(N, D, H, W, Cout)
        if extra_bias is not None:
            out = out + extra_bias[:, None, None, None, :].astype(out.dtype)
        return out
    if stride == 1 and padding == 1 and Cin >= 8:
        return conv3d_fused3x3(x, w, b, extra_bias, out_dtype=out_dtype)
    return conv3d_im2col(x, w, b, stride, padding, extra_bias, out_dtype=out_dtype)


# ----------------------------------------------------------------------------
# JAX glue ops (norms, activations, pooling) — channels-last
# ----------------------------------------------------------------------------

def silu(x):
    return x * jax.nn.sigmoid(x)


def linear(x, p, act=None, out_dtype=jnp.float32):
    # p['w']: (out, in) like torch.nn.Linear
    return pallas_matmul_bias(x, p["w"].T, p["b"], act=act, out_dtype=out_dtype)


def group_norm(x, p, num_groups=32, eps=1e-5):
    N, D, H, W, C = x.shape
    g = num_groups
    xf = x.astype(jnp.float32)
    xg = xf.reshape(N, D, H, W, g, C // g)
    mean = xg.mean(axis=(1, 2, 3, 5), keepdims=True)
    var = xg.var(axis=(1, 2, 3, 5), keepdims=True)
    xn = ((xg - mean) * lax.rsqrt(var + eps)).reshape(N, D, H, W, C)
    return xn * p["w"] + p["b"]


def batch_norm(x, p, eps=1e-5):
    # training-mode batch statistics (biased variance), affine params
    xf = x.astype(jnp.float32)
    mean = xf.mean(axis=(0, 1, 2, 3), keepdims=True)
    var = xf.var(axis=(0, 1, 2, 3), keepdims=True)
    xn = (xf - mean) * lax.rsqrt(var + eps)
    return xn * p["w"] + p["b"]


def max_pool3d_3x3_s1_p1(x):
    return lax.reduce_window(
        x, -jnp.inf, lax.max,
        (1, 3, 3, 3, 1), (1, 1, 1, 1, 1),
        padding=((0, 0), (1, 1), (1, 1), (1, 1), (0, 0)))


def upsample_nearest2(x):
    x = jnp.repeat(x, 2, axis=1)
    x = jnp.repeat(x, 2, axis=2)
    x = jnp.repeat(x, 2, axis=3)
    return x


def timestep_embedding(timesteps, dim, max_period=10000):
    half = dim // 2
    freqs = jnp.exp(
        -math.log(max_period) * jnp.arange(half, dtype=jnp.float32) / half)
    args = timesteps[:, None].astype(jnp.float32) * freqs[None]
    emb = jnp.concatenate([jnp.cos(args), jnp.sin(args)], axis=-1)
    if dim % 2:
        emb = jnp.concatenate([emb, jnp.zeros_like(emb[:, :1])], axis=-1)
    return emb


# ----------------------------------------------------------------------------
# Blocks
# ----------------------------------------------------------------------------

def residual_block(x, emb, p):
    t = linear(silu(emb), p["time"])                       # (N, Cout)
    h = silu(group_norm(x, p["norm1"]))
    # conv1: time add fused as per-sample bias; bf16 out (next op is GroupNorm
    # which recomputes stats in f32 anyway) -> halves writeback.
    h = conv3d(h, p["conv1"], padding=1, extra_bias=t, out_dtype=jnp.bfloat16)
    # Dropout(p=0) is identity
    h = silu(group_norm(h, p["norm2"]))
    h = conv3d(h, p["conv2"], padding=1)
    if "shortcut" in p:
        x = conv3d(x, p["shortcut"], padding=0)
    return h + x


def subspace3d(x, p):
    C = x.shape[-1]
    # depthwise 1x1 conv (groups = nin): per-channel scale + bias
    out = x * p["dws_w"] + p["dws_b"]
    out = batch_norm(out, p["bn_dws"])
    out = jax.nn.relu(out)
    out = max_pool3d_3x3_s1_p1(out)
    # point conv C -> 1: VPU reduction instead of an N=1 MXU matmul
    pw = p["point"]["w"].reshape(C)
    out = jnp.sum(out * pw, axis=-1, keepdims=True) + p["point"]["b"]
    out = batch_norm(out, p["bn_point"])
    out = jax.nn.relu(out)
    m, d_, h_, w_, n = out.shape
    flat = jax.nn.softmax(out.reshape(m, d_ * h_ * w_ * n), axis=1)
    out = flat.reshape(m, d_, h_, w_, n)
    out = jnp.broadcast_to(out, x.shape)
    return out * x + x


def ulsam3d(x, p, num_splits=4):
    chunks = jnp.split(x, num_splits, axis=-1)
    outs = [subspace3d(chunks[i], p["subspaces"][i]) for i in range(num_splits)]
    return jnp.concatenate(outs, axis=-1)


def mha3d(x, p, num_heads):
    N, D, H, W, C = x.shape
    T = D * H * W
    hd = C // num_heads
    xs = x.reshape(N * T, C)
    # fused q/k/v projection: one (C, 3C) matmul, bf16 out (feeds the fused
    # attention kernel directly).
    wqkv = jnp.concatenate(
        [p["q"]["w"].T, p["k"]["w"].T, p["v"]["w"].T], axis=1)
    bqkv = jnp.concatenate([p["q"]["b"], p["k"]["b"], p["v"]["b"]])
    qkv = pallas_matmul_bias(xs, wqkv, bqkv, out_dtype=jnp.bfloat16)  # (N*T, 3C)
    # head split/merge + softmax + output projection fused in one kernel
    o = pallas_attention_proj(qkv, p["out"]["w"].T, p["out"]["b"],
                              N, T, num_heads, hd)
    return o.reshape(N, D, H, W, C)


def transformer_block(x, p, num_heads):
    x = group_norm(x, p["norm1"])
    x = x + mha3d(x, p["attn"], num_heads)
    x = group_norm(x, p["norm2"])
    N, D, H, W, C = x.shape
    xs = x.reshape(N * D * H * W, C)
    f = linear(xs, p["ff1"], out_dtype=jnp.bfloat16)
    f = jax.nn.gelu(f, approximate=False)                  # nn.GELU default = exact
    f = linear(f, p["ff2"])
    xs = xs + f
    return xs.reshape(N, D, H, W, C)


def apply_layer(layer, x, emb, num_heads):
    kind, p = layer
    if kind == "conv":
        return conv3d(x, p, padding=1)
    if kind == "res":
        return residual_block(x, emb, p)
    if kind == "ulsam":
        return ulsam3d(x, p)
    if kind == "transformer":
        return transformer_block(x, p, num_heads)
    if kind == "down":
        return conv3d(x, p, stride=2, padding=1)
    if kind == "up":
        # bf16 before the nearest-neighbour repeat: halves the upsample copy
        return conv3d(upsample_nearest2(x.astype(jnp.bfloat16)), p, padding=1)
    raise ValueError(kind)


# ----------------------------------------------------------------------------
# Parameter construction (deterministic, mirrors the PyTorch __init__ shapes)
# ----------------------------------------------------------------------------

_rng = np.random.default_rng(0)


def _uniform(shape, bound):
    return jnp.asarray(_rng.uniform(-bound, bound, size=shape).astype(np.float32))


def linear_params(in_f, out_f):
    b = 1.0 / math.sqrt(in_f)
    return {"w": _uniform((out_f, in_f), b), "b": _uniform((out_f,), b)}


def conv3d_params(in_c, out_c, k):
    b = 1.0 / math.sqrt(in_c * k ** 3)
    return {"w": _uniform((out_c, in_c, k, k, k), b), "b": _uniform((out_c,), b)}


def gn_params(c):
    return {"w": jnp.ones((c,), jnp.float32), "b": jnp.zeros((c,), jnp.float32)}


def res_params(in_c, out_c, time_c):
    p = {
        "norm1": gn_params(in_c),
        "conv1": conv3d_params(in_c, out_c, 3),
        "time": linear_params(time_c, out_c),
        "norm2": gn_params(out_c),
        "conv2": conv3d_params(out_c, out_c, 3),
    }
    if in_c != out_c:
        p["shortcut"] = conv3d_params(in_c, out_c, 1)
    return p


def subspace_params(nin):
    return {
        "dws_w": _uniform((nin,), 1.0),  # Conv3d(nin, nin, 1, groups=nin): fan_in=1
        "dws_b": _uniform((nin,), 1.0),
        "bn_dws": gn_params(nin),
        "point": conv3d_params(nin, 1, 1),
        "bn_point": gn_params(1),
    }


def ulsam_params(nin, num_splits=4):
    g = nin // num_splits
    return {"subspaces": [subspace_params(g) for _ in range(num_splits)]}


def transformer_params(c):
    return {
        "norm1": gn_params(c),
        "norm2": gn_params(c),
        "attn": {
            "q": linear_params(c, c),
            "k": linear_params(c, c),
            "v": linear_params(c, c),
            "out": linear_params(c, c),
        },
        "ff1": linear_params(c, 4 * c),
        "ff2": linear_params(4 * c, c),
    }


def build_unet(
    in_channels=1,
    model_channels=32,
    out_channels=1,
    num_res_blocks=2,
    attention_resolutions=(8, 16),
    transformer_resolutions=(8, 16),
    channel_mult=(1, 2, 2, 2),
    num_heads=4,
):
    params = {}
    params["time_embed"] = [
        linear_params(model_channels, model_channels * 4),
        linear_params(model_channels * 4, model_channels * 4),
    ]

    down_blocks = [[("conv", conv3d_params(in_channels, model_channels, 3))]]
    down_block_chans = [model_channels]
    ch = model_channels
    ds = 1
    for level, mult in enumerate(channel_mult):
        for _ in range(num_res_blocks):
            layers = [("res", res_params(ch, mult * model_channels, model_channels * 4))]
            ch = mult * model_channels
            if ds in attention_resolutions:
                layers.append(("ulsam", ulsam_params(ch, 4)))
            if ds in transformer_resolutions:
                layers.append(("transformer", transformer_params(ch)))
            down_blocks.append(layers)
            down_block_chans.append(ch)
        if level != len(channel_mult) - 1:
            down_blocks.append([("down", conv3d_params(ch, ch, 3))])
            down_block_chans.append(ch)
            ds *= 2
    params["down_blocks"] = down_blocks

    params["middle"] = [
        ("res", res_params(model_channels * 2, model_channels * 2, model_channels * 4)),
        ("ulsam", ulsam_params(model_channels * 2, 4)),
        ("res", res_params(model_channels * 2, model_channels * 2, model_channels * 4)),
    ]

    up_blocks = []
    for level, mult in list(enumerate(channel_mult))[::-1]:
        for i in range(num_res_blocks + 1):
            layers = [
                (
                    "res",
                    res_params(
                        ch + down_block_chans.pop(),
                        model_channels * mult,
                        model_channels * 4,
                    ),
                )
            ]
            ch = model_channels * mult
            if ds in attention_resolutions:
                layers.append(("ulsam", ulsam_params(ch, 4)))
            if ds in transformer_resolutions:
                layers.append(("transformer", transformer_params(ch)))
            if level and i == num_res_blocks:
                layers.append(("up", conv3d_params(ch, ch, 3)))
                ds //= 2
            up_blocks.append(layers)
    params["up_blocks"] = up_blocks

    params["out"] = {
        "norm": gn_params(ch),
        "conv": conv3d_params(model_channels, out_channels, 3),
    }
    cfg = {"model_channels": model_channels, "num_heads": num_heads}
    return params, cfg


# ----------------------------------------------------------------------------
# Forward pass (mirrors UNet.forward); public interface stays NCDHW
# ----------------------------------------------------------------------------

def unet_forward(params, cfg, x, timesteps):
    mc = cfg["model_channels"]
    num_heads = cfg["num_heads"]

    temb = timestep_embedding(timesteps, mc)
    emb = linear(temb, params["time_embed"][0], act="silu")
    emb = linear(emb, params["time_embed"][1])

    # NCDHW -> NDHWC once
    h = jnp.transpose(x, (0, 2, 3, 4, 1))

    hs = []
    for block in params["down_blocks"]:
        for layer in block:
            h = apply_layer(layer, h, emb, num_heads)
        hs.append(h)

    for layer in params["middle"]:
        h = apply_layer(layer, h, emb, num_heads)

    for block in params["up_blocks"]:
        h = jnp.concatenate([h, hs.pop()], axis=-1)
        for layer in block:
            h = apply_layer(layer, h, emb, num_heads)

    h = silu(group_norm(h, params["out"]["norm"]))
    h = conv3d(h, params["out"]["conv"], padding=1)
    return jnp.transpose(h, (0, 4, 1, 2, 3))              # back to NCDHW


# ----------------------------------------------------------------------------

if __name__ == "__main__":
    key = jax.random.PRNGKey(0)
    k_x, k_t = jax.random.split(key)

    B, Cin, S = 2, 1, 16           # spatial 16^3 so the deepest level (ds=8) is 2^3
    model_channels = 32            # divisible by 32 (GroupNorm) and by 4 (heads/ULSAM)

    x = jax.random.normal(k_x, (B, Cin, S, S, S), dtype=jnp.float32)
    timesteps = jax.random.randint(k_t, (B,), 0, 1000).astype(jnp.int32)

    params, cfg = build_unet(
        in_channels=Cin,
        model_channels=model_channels,
        out_channels=1,
        num_res_blocks=2,
        attention_resolutions=(8, 16),
        transformer_resolutions=(8, 16),
        channel_mult=(1, 2, 2, 2),
        num_heads=4,
    )

    out = unet_forward(params, cfg, x, timesteps)
    out = jax.block_until_ready(out)
    assert out.shape == (B, 1, S, S, S), out.shape
    assert bool(jnp.all(jnp.isfinite(out)))
    print("KERNEL_OK")
</pallas_src>

<mosaic_0001>
module attributes {stable_mosaic.version = 11 : i64} {
  func.func @kernel(%arg0: i32, %arg1: memref<8x32xbf16, #tpu.memory_space<vmem>>, %arg2: memref<32x128xbf16, #tpu.memory_space<vmem>>, %arg3: memref<1x128xf32, #tpu.memory_space<vmem>>, %arg4: memref<8x128xf32, #tpu.memory_space<vmem>>) attributes {dimension_semantics = [#tpu.dimension_semantics<parallel>], iteration_bounds = array<i64: 1>, scalar_prefetch = 0 : i64, scratch_operands = 0 : i64, tpu.core_type = #tpu.core_type<tc>, window_params = [{transform_indices = @transform_0, window_bounds = array<i64: 8, 32>}, {pipeline_mode = #tpu.pipeline_mode<synchronous>, transform_indices = @transform_1, window_bounds = array<i64: 32, 128>}, {pipeline_mode = #tpu.pipeline_mode<synchronous>, transform_indices = @transform_2, window_bounds = array<i64: 1, 128>}, {transform_indices = @transform_3, window_bounds = array<i64: 8, 128>}]} {
    %c0 = arith.constant 0 : index
    %c0_0 = arith.constant 0 : index
    %0 = vector.load %arg1[%c0, %c0_0] : memref<8x32xbf16, #tpu.memory_space<vmem>>, vector<8x32xbf16>
    %c0_1 = arith.constant 0 : index
    %c0_2 = arith.constant 0 : index
    %1 = vector.load %arg2[%c0_1, %c0_2] : memref<32x128xbf16, #tpu.memory_space<vmem>>, vector<32x128xbf16>
    %cst = arith.constant dense<0.000000e+00> : vector<8x128xf32>
    %2 = tpu.matmul %0, %1, %cst {dimension_numbers = #tpu.dot_dimension_numbers<[1], [0], [0], [1], [0, 0, 1, 1], [], []>} : vector<8x32xbf16>, vector<32x128xbf16>, vector<8x128xf32> -> vector<8x128xf32>
    %c0_3 = arith.constant 0 : index
    %c0_4 = arith.constant 0 : index
    %3 = vector.load %arg3[%c0_3, %c0_4] : memref<1x128xf32, #tpu.memory_space<vmem>>, vector<1x128xf32>
    %4 = vector.broadcast %3 : vector<1x128xf32> to vector<8x128xf32>
    %5 = arith.addf %2, %4 : vector<8x128xf32>
    %6 = arith.negf %5 : vector<8x128xf32>
    %7 = math.exp %6 : vector<8x128xf32>
    %cst_5 = arith.constant 1.000000e+00 : f32
    %8 = vector.broadcast %cst_5 : f32 to vector<8x128xf32>
    %9 = arith.addf %8, %7 : vector<8x128xf32>
    %10 = arith.divf %8, %9 : vector<8x128xf32>
    %11 = arith.mulf %5, %10 : vector<8x128xf32>
    %c0_6 = arith.constant 0 : index
    %c0_7 = arith.constant 0 : index
    %12 = vector.load %arg4[%c0_6, %c0_7] : memref<8x128xf32, #tpu.memory_space<vmem>>, vector<8x128xf32>
    tpu.vector_store %arg4[%c0_6, %c0_7], %11 {strides = array<i32>} : memref<8x128xf32, #tpu.memory_space<vmem>>, vector<8x128xf32>,
    return
  }
  func.func @transform_0(%arg0: i32) -> (i32, i32) {
    %c0_i32 = arith.constant 0 : i32
    %c0_i32_0 = arith.constant 0 : i32
    return %arg0, %c0_i32 : i32, i32
  }
  func.func @transform_1(%arg0: i32) -> (i32, i32) {
    %c0_i32 = arith.constant 0 : i32
    %c0_i32_0 = arith.constant 0 : i32
    %c0_i32_1 = arith.constant 0 : i32
    return %c0_i32, %c0_i32_0 : i32, i32
  }
  func.func @transform_2(%arg0: i32) -> (i32, i32) {
    %c0_i32 = arith.constant 0 : i32
    %c0_i32_0 = arith.constant 0 : i32
    %c0_i32_1 = arith.constant 0 : i32
    return %c0_i32, %c0_i32_0 : i32, i32
  }
  func.func @transform_3(%arg0: i32) -> (i32, i32) {
    %c0_i32 = arith.constant 0 : i32
    %c0_i32_0 = arith.constant 0 : i32
    return %arg0, %c0_i32 : i32, i32
  }
}

</mosaic_0001>

<llo_original>
// kernel: tpu_custom_call.1
$region0: #{tpu_custom_call.1}
  #allocation0 [shape = 'u32[]', space=smem, size = 0x4, offset = 0x4, fixed_abs, tag = 'smem constant byte address 0x4 - core index']
  #allocation1 [shape = 'u32[144,128]{1,0:T(1,128)}', space=vmem, size = 0x12000, scoped, tag = 'internal scratch']
  %s0 = inlined_call_operand.hbm [shape: bf16[8,32], index: 0, kind: input, shape index: {}]
  %s1 = inlined_call_operand.hbm [shape: bf16[32,128], index: 1, kind: input, shape index: {}]
  %s2 = inlined_call_operand.vmem [shape: f32[1,128], index: 2, kind: input, shape index: {}]
  %s3 = inlined_call_operand.hbm [shape: f32[8,128], index: 3, kind: output, shape index: {}]
  %s4 = sld [smem:[#allocation0]]
  $region30: #{tpu_custom_call.1} parent=0
    _
  %s6 = ssub.s32 1, %s4
  %s7 = scalar_select 0, %s6, %s4
  $region1: #{tpu_custom_call.1} parent=0
    #allocation2 [shape = 'u8[2048]{0}', space=vmem, size = 0x800, scoped, tag = 'input window, operand 0, single buffered']
    #allocation3 [shape = 's32[1]{0}', space=sflag, size = 0x4, scoped, tag = 'scoped memory for tpu_custom_call.1']
    #allocation4 [shape = 's32[1]{0}', space=sflag, size = 0x4, scoped, tag = 'scoped memory for tpu_custom_call.1']
    #allocation5 [shape = 'u8[8192]{0}', space=vmem, size = 0x2000, scoped, tag = 'input window, operand 1, single buffered']
    #allocation6 [shape = 's32[1]{0}', space=sflag, size = 0x4, scoped, tag = 'scoped memory for tpu_custom_call.1']
    #allocation7 [shape = 'u8[4096]{0}', space=vmem, size = 0x1000, scoped, tag = 'output window, operand 0, single buffered']
    %8 = vsyncpa [#allocation3], 0
    %9 = vsyncpa [#allocation6], 0
    %10 = vsyncpa [#allocation4], 0
    // Predicated region
    $region2: #{tpu_custom_call.1} parent=1 // pred_check
      _
    $region3: #{tpu_custom_call.1} parent=1 // pred_check_branch
      %12 = sbr.rel (0) target = $region5
    $region4: #{tpu_custom_call.1} parent=1 // pred_region
      %s14 = ssub.s32 64, 64
      %15 = vsyncadd [#allocation3], %s14
      %s17 = sshll.u32 [#allocation2], 4
      %s18 = int_to_ptr.vmem [resolvable:$true] %s17
      %20 = dma.hbm_to_vmem [thread:$0]  %s0, 64, %s18, [#allocation3]
    $region5: #{tpu_custom_call.1} parent=1 // pred_fallthru
      _
    // Predicated region
    $region6: #{tpu_custom_call.1} parent=1 // pred_check
      _
    $region7: #{tpu_custom_call.1} parent=1 // pred_check_branch
      %22 = sbr.rel (0) target = $region9
    $region8: #{tpu_custom_call.1} parent=1 // pred_region
      %s24 = ssub.s32 256, 256
      %25 = vsyncadd [#allocation6], %s24
      %s26 = sshll.u32 [#allocation5], 4
      %s27 = int_to_ptr.vmem [resolvable:$true] %s26
      %32 = dma.hbm_to_vmem [thread:$0]  %s1, 256, %s27, [#allocation6], 64, 64, 4
    $region9: #{tpu_custom_call.1} parent=1 // pred_fallthru
      _
    // Predicated region
    $region10: #{tpu_custom_call.1} parent=1 // pred_check
      _
    $region11: #{tpu_custom_call.1} parent=1 // pred_check_branch
      %34 = sbr.rel (0) target = $region13
    $region12: #{tpu_custom_call.1} parent=1 // pred_region
      _
    $region13: #{tpu_custom_call.1} parent=1 // pred_fallthru
      _
    // Predicated region
    $region14: #{tpu_custom_call.1} parent=1 // pred_check
      _
    $region15: #{tpu_custom_call.1} parent=1 // pred_check_branch
      %36 = sbr.rel (0) target = $region17
    $region16: #{tpu_custom_call.1} parent=1 // pred_region
      %37 = dma.done [#allocation3], 64
    $region17: #{tpu_custom_call.1} parent=1 // pred_fallthru
      _
    // Predicated region
    $region18: #{tpu_custom_call.1} parent=1 // pred_check
      _
    $region19: #{tpu_custom_call.1} parent=1 // pred_check_branch
      %39 = sbr.rel (0) target = $region21
    $region20: #{tpu_custom_call.1} parent=1 // pred_region
      %40 = dma.done [#allocation6], 256
    $region21: #{tpu_custom_call.1} parent=1 // pred_fallthru
      _
    %v42 = vld [vmem:[#allocation2] sm:$0xf]
    %v43 = vld [vmem:[#allocation5] sm:$0xf]
    %v44 = vld [vmem:[#allocation5 + $0x4] sm:$0xf]
    %v45 = vld [vmem:[#allocation5 + $0x8] sm:$0xf]
    %v46 = vld [vmem:[#allocation5 + $0xc] sm:$0xf]
    %v47 = vld [vmem:[%s2] sm:$0x1]
    %v49 = vlaneseq
    %v50 = vshrl.u32 %v49, 7
    %v51 = vsub.s32 0, %v50
    %v52 = vrot.slane %v47, %v51
    %v58 = vunpack.c.l.b16 %v43
    %v59 = vunpack.c.l.b16 %v44
    %v60 = vunpack.c.l.b16 %v45
    %v61 = vunpack.c.l.b16 %v46
    %v62 = vpack.c.b16 %v59, %v58
    %v63 = vpack.c.b16 %v61, %v60
    %vm66 = vcmask 261120
    %v68 = vsel %vm66, %v42, 0
    %70 = vmatprep.subr.bf16.mxu0 0
    %71 = vmatpush1.bf16.msra.mxu0 %v62
    %72 = vmatprep.subr.bf16.mxu0 0
    %73 = vmatpush1.bf16.msra.mxu0 %v63
    %74 = vmatprep.subr.bf16.mxu0 0
    %75 = vmatpush1.bf16.msra.mxu0 0
    %76 = vmatprep.subr.bf16.mxu0 0
    %77 = vmatpush1.bf16.msra.mxu0 0
    %78 = vmatprep.subr.bf16.mxu0 0
    %79 = vmatpush1.bf16.msra.mxu0 0
    %80 = vmatprep.subr.bf16.mxu0 0
    %81 = vmatpush1.bf16.msra.mxu0 0
    %82 = vmatprep.subr.bf16.mxu0 0
    %83 = vmatpush1.bf16.msra.mxu0 0
    %84 = vmatprep.subr.bf16.mxu0 0
    %85 = vmatpush1.bf16.msra.mxu0 0
    %86 = vmatprep.subr.bf16.mxu0 0
    %87 = vmatpush1.bf16.msra.mxu0 0
    %88 = vmatprep.subr.bf16.mxu0 0
    %89 = vmatpush1.bf16.msra.mxu0 0
    %90 = vmatprep.subr.bf16.mxu0 0
    %91 = vmatpush1.bf16.msra.mxu0 0
    %92 = vmatprep.subr.bf16.mxu0 0
    %93 = vmatpush1.bf16.msra.mxu0 0
    %94 = vmatprep.subr.bf16.mxu0 0
    %95 = vmatpush1.bf16.msra.mxu0 0
    %96 = vmatprep.subr.bf16.mxu0 0
    %97 = vmatpush1.bf16.msra.mxu0 0
    %98 = vmatprep.subr.bf16.mxu0 0
    %99 = vmatpush1.bf16.msra.mxu0 0
    %100 = vmatprep.subr.bf16.mxu0 0
    %101 = vmatpush1.bf16.msra.mxu0 0
    %102 = vmatprep.mubr.bf16.mxu0 0
    %103 = vmatmul.mubr.bf16.gmra.mrb[0].mxu0 %v68
    %v104 = vpop.f32.mrb[0].mxu0
    %v105 = vadd.f32 %v52, %v104
    %v106 = vpop.f32.mrb[0].mxu0
    %v107 = vpop.f32.mrb[0].mxu0
    %v108 = vpop.f32.mrb[0].mxu0
    %109 = vdwg.mxu0
    %v110 = vxor.u32 %v105, 2147483648
    %v111 = vmul.f32 %v110, 1.442695
    %v112 = vpow.pop %v111
    %v113 = vadd.f32 %v112, 1.0
    %v114 = vrcp.pop %v113
    %v115 = vmul.f32 1.0, %v114
    %v116 = vmul.f32 %v105, %v115
    %117 = vst [vmem:[#allocation7] sm:$0xff] %v116
    // Predicated region
    $region22: #{tpu_custom_call.1} parent=1 // pred_check
      _
    $region23: #{tpu_custom_call.1} parent=1 // pred_check_branch
      %119 = sbr.rel (0) target = $region25
    $region24: #{tpu_custom_call.1} parent=1 // pred_region
      %s121 = ssub.s32 128, 128
      %122 = vsyncadd [#allocation4], %s121
      %s124 = sshll.u32 [#allocation7], 4
      %s125 = int_to_ptr.vmem [resolvable:$true] %s124
      %127 = dma.vmem_to_hbm [thread:$0]  %s125, 128, %s3, [#allocation4]
    $region25: #{tpu_custom_call.1} parent=1 // pred_fallthru
      _
    // Predicated region
    $region26: #{tpu_custom_call.1} parent=1 // pred_check
      _
    $region27: #{tpu_custom_call.1} parent=1 // pred_check_branch
      %129 = sbr.rel (0) target = $region29
    $region28: #{tpu_custom_call.1} parent=1 // pred_region
      %130 = dma.done [#allocation4], 128
    $region29: #{tpu_custom_call.1} parent=1 // pred_fallthru
      _
    %131 = vsyncpa [#allocation3], 1
    %132 = vsyncpa [#allocation6], 1
    %133 = vsyncpa [#allocation4], 1

</llo_original>
